<compile_context>
chip_gen: v5e
topology: v5e:2x2
jax: 0.10.0
libtpu: 0.0.40
codegen_flags: <defaults>
</compile_context>

<pallas_src>
import jax
import jax.numpy as jnp
from jax import lax
from jax.experimental import pallas as pl
from jax.experimental.pallas import tpu as pltpu


_NEG = -1e30  # finite sentinel: 0 * _NEG == 0 (no NaN), exp(_NEG - x) underflows to 0


def _gat_r_kernel(eh_ref, er_ref, rel_ref, xt_ref, out_ref, m_ref, l_ref, acc_ref):
    nr_pad = acc_ref.shape[0]
    te = rel_ref.shape[1]
    e_idx = pl.program_id(1)          # edge-tile index (innermost, "arbitrary")
    n_e = pl.num_programs(1)

    @pl.when(e_idx == 0)
    def _init():
        m_ref[...] = jnp.full(m_ref.shape, _NEG, m_ref.dtype)
        l_ref[...] = jnp.zeros(l_ref.shape, l_ref.dtype)
        acc_ref[...] = jnp.zeros(acc_ref.shape, acc_ref.dtype)

    # Per-edge logits: leaky_relu(e_h + e_r), lane-major [1, TE].
    z = eh_ref[...] + er_ref[...]
    logit = jnp.where(z > 0, z, jnp.float32(0.01) * z)

    # Relation one-hot built directly in scatter orientation [NR_PAD, TE].
    rows = lax.broadcasted_iota(jnp.int32, (nr_pad, te), 0)
    oh = rel_ref[...] == rows
    ohf = oh.astype(jnp.float32)

    # Online (flash-style) grouped softmax across edge tiles.
    masked = jnp.where(oh, logit, _NEG)
    tile_max = jnp.max(masked, axis=1, keepdims=True)            # [NR_PAD, 1]
    m_new = jnp.maximum(m_ref[...], tile_max)
    corr = jnp.exp(m_ref[...] - m_new)                            # rescale old sums
    pe_max = jnp.sum(ohf * m_new, axis=0, keepdims=True)          # m_new[rel_e], [1, TE]
    ex = jnp.exp(logit - pe_max)                                  # [1, TE]
    l_ref[...] = corr * l_ref[...] + jnp.sum(ohf * ex, axis=1, keepdims=True)

    # Scatter-add: [NR_PAD, TE] @ [TE, TD] (plain dot, no transpose).
    p = (ohf * ex).astype(xt_ref.dtype)
    acc_ref[...] = corr * acc_ref[...] + jnp.dot(
        p, xt_ref[...], preferred_element_type=jnp.float32)
    m_ref[...] = m_new

    @pl.when(e_idx == n_e - 1)
    def _finalize():
        l = l_ref[...]
        safe_l = jnp.where(l > 0, l, jnp.float32(1.0))
        out_ref[...] = jnp.where(
            l > 0, acc_ref[...] / safe_l, jnp.float32(0.0)).astype(out_ref.dtype)


def _round_up(x, m):
    return ((x + m - 1) // m) * m


def gat_r_forward(x_e, x_r, edge_index, rel, w_h, w_t, w_r, *,
                  edge_tile=1024, de_tile=256, use_bf16=False):
    """Pallas equivalent of GAT_R.forward.

    w_t is accepted for parity with the torch module but unused (e_t is computed
    and immediately discarded in the reference forward).
    """
    del w_t  # dead code in the torch forward
    x_e = x_e.astype(jnp.float32)
    x_r = x_r.astype(jnp.float32)
    Ne, De = x_e.shape
    Nr, _ = x_r.shape
    head = edge_index[0].astype(jnp.int32)
    tail = edge_index[1].astype(jnp.int32)
    relv = rel.astype(jnp.int32)
    E = int(head.shape[0])

    # Projections + per-edge gathers: O(N*D + E*De) XLA work in the wrapper,
    # replacing the O(E*Ne*De) one-hot gather matmuls of the naive kernel.
    eh_edge = (x_e @ w_h.astype(jnp.float32)).reshape(-1)[head]     # [E]
    er_edge = (x_r @ w_r.astype(jnp.float32)).reshape(-1)[relv]     # [E]
    x_tail = jnp.take(x_e, tail, axis=0)                            # [E, De]

    # TPU-friendly tile sizes / padded shapes.
    te = _round_up(min(edge_tile, _round_up(E, 128)), 128)
    e_pad = _round_up(E, te)
    td = _round_up(min(de_tile, _round_up(De, 128)), 128)
    de_pad = _round_up(De, td)
    nr_pad = _round_up(Nr + 1, 8)        # +1 spare row: dummy group for padded edges

    comp_dtype = jnp.bfloat16 if use_bf16 else jnp.float32

    eh_p = jnp.zeros((1, e_pad), jnp.float32).at[0, :E].set(eh_edge)
    er_p = jnp.zeros((1, e_pad), jnp.float32).at[0, :E].set(er_edge)
    rel_p = jnp.full((1, e_pad), Nr, jnp.int32).at[0, :E].set(relv)
    xt_p = jnp.zeros((e_pad, de_pad), comp_dtype).at[:E, :De].set(
        x_tail.astype(comp_dtype))

    n_et = e_pad // te
    n_dt = de_pad // td
    xt_bytes = 2 if use_bf16 else 4

    # VMEM budget: double-buffered input tiles + resident output + scratch +
    # in-kernel [nr_pad, te] temporaries, with 2x headroom (kept under v7x's 64 MiB).
    working = (2 * 3 * 4 * te
               + 2 * te * td * xt_bytes
               + 2 * nr_pad * td * 4
               + nr_pad * (td + 2) * 4
               + 8 * nr_pad * te * 4)
    vmem_limit = int(min(max(2 * working, 16 << 20), 64 << 20))

    cost = pl.CostEstimate(
        flops=int(2 * e_pad * nr_pad * de_pad + 16 * e_pad * nr_pad * n_dt),
        transcendentals=int(2 * e_pad * n_dt + 2 * nr_pad * n_et * n_dt),
        bytes_accessed=int(12 * e_pad + xt_bytes * e_pad * de_pad
                           + 4 * nr_pad * de_pad),
    )

    grid_spec = pltpu.PrefetchScalarGridSpec(
        num_scalar_prefetch=0,
        grid=(n_dt, n_et),               # (De tiles: parallel, edge tiles: arbitrary)
        in_specs=[
            pl.BlockSpec((1, te), lambda d, e: (0, e)),     # e_h per edge
            pl.BlockSpec((1, te), lambda d, e: (0, e)),     # e_r per edge
            pl.BlockSpec((1, te), lambda d, e: (0, e)),     # rel id per edge
            pl.BlockSpec((te, td), lambda d, e: (e, d)),    # x_e[tail]
        ],
        out_specs=pl.BlockSpec((nr_pad, td), lambda d, e: (0, d)),
        scratch_shapes=[
            pltpu.VMEM((nr_pad, 1), jnp.float32),    # running per-rel max
            pltpu.VMEM((nr_pad, 1), jnp.float32),    # running per-rel sum
            pltpu.VMEM((nr_pad, td), jnp.float32),   # output accumulator
        ],
    )

    out_pad = pl.pallas_call(
        _gat_r_kernel,
        out_shape=jax.ShapeDtypeStruct((nr_pad, de_pad), jnp.float32),
        grid_spec=grid_spec,
        compiler_params=pltpu.CompilerParams(
            dimension_semantics=("parallel", "arbitrary"),
            vmem_limit_bytes=vmem_limit),
        cost_estimate=cost,
    )(eh_p, er_p, rel_p, xt_p)

    # Only rows 0..Nr-1 of the Ne-row output can be nonzero (rel < Nr).
    nrows = min(Nr, Ne)
    top = out_pad[:nrows, :De]
    if nrows < Ne:
        return jnp.concatenate(
            [top, jnp.zeros((Ne - nrows, De), jnp.float32)], axis=0)
    return top


def gat_r_reference(x_e, x_r, edge_index, rel, w_h, w_t, w_r):
    """Pure-JAX reference for correctness checking."""
    del w_t
    e_h = (x_e @ w_h)[:, 0][edge_index[0]]
    e_r = (x_r @ w_r)[:, 0][rel]
    z = e_h + e_r
    logit = jnp.where(z > 0, z, 0.01 * z).astype(jnp.float32)
    Nr = x_r.shape[0]
    Ne = x_e.shape[0]
    gmax = jax.ops.segment_max(logit, rel, num_segments=Nr)
    gmax = jnp.where(jnp.isfinite(gmax), gmax, 0.0)
    ex = jnp.exp(logit - gmax[rel])
    gsum = jax.ops.segment_sum(ex, rel, num_segments=Nr)
    alpha = ex / gsum[rel]
    weighted = alpha[:, None] * x_e[edge_index[1]]
    return jax.ops.segment_sum(weighted, rel, num_segments=Ne)


def _make_problem(key, Ne, De, Nr, Dr, E):
    k = jax.random.split(key, 8)
    x_e = jax.random.normal(k[0], (Ne, De), jnp.float32)
    x_r = jax.random.normal(k[1], (Nr, Dr), jnp.float32)
    # Linear(d, 1, bias=False).weight is [1, d]; we store its transpose [d, 1].
    w_h = jax.random.normal(k[2], (De, 1), jnp.float32) * 0.1
    w_t = jax.random.normal(k[3], (De, 1), jnp.float32) * 0.1
    w_r = jax.random.normal(k[4], (Dr, 1), jnp.float32) * 0.1
    head = jax.random.randint(k[5], (E,), 0, Ne, jnp.int32)
    tail = jax.random.randint(k[6], (E,), 0, Ne, jnp.int32)
    rel = jax.random.randint(k[7], (E,), 0, Nr, jnp.int32)
    edge_index = jnp.stack([head, tail], axis=0)
    return x_e, x_r, edge_index, rel, w_h, w_t, w_r


if __name__ == "__main__":
    key = jax.random.PRNGKey(0)
    k1, k2 = jax.random.split(key)

    # --- small single-tile problem ---
    args = _make_problem(k1, Ne=16, De=32, Nr=8, Dr=16, E=64)
    out = gat_r_forward(*args)
    jax.block_until_ready(out)
    ref = gat_r_reference(*args)
    assert out.shape == (16, 32)
    err = float(jnp.max(jnp.abs(out - ref)))
    assert jnp.allclose(out, ref, atol=1e-4, rtol=1e-4), f"f32 max abs err {err}"

    # bf16 MXU operands (v6e/v7x optimization), looser tolerance.
    out_bf = gat_r_forward(*args, use_bf16=True)
    jax.block_until_ready(out_bf)
    err_bf = float(jnp.max(jnp.abs(out_bf - ref)))
    assert jnp.allclose(out_bf, ref, atol=1e-1, rtol=1e-1), f"bf16 max abs err {err_bf}"

    # --- multi-tile problem: exercises the edge-tiled online softmax and the
    # parallel De grid axis (3 edge tiles x 2 De tiles), plus padding. ---
    args2 = _make_problem(k2, Ne=40, De=160, Nr=5, Dr=12, E=300)
    out2 = gat_r_forward(*args2, edge_tile=128, de_tile=128)
    jax.block_until_ready(out2)
    ref2 = gat_r_reference(*args2)
    assert out2.shape == (40, 160)
    err2 = float(jnp.max(jnp.abs(out2 - ref2)))
    assert jnp.allclose(out2, ref2, atol=1e-4, rtol=1e-4), f"multi-tile max abs err {err2}"

    print("KERNEL_OK")
</pallas_src>

<mosaic_0001>
module attributes {stable_mosaic.version = 11 : i64} {
  func.func @_gat_r_kernel(%arg0: i32, %arg1: i32, %arg2: memref<1x128xf32, #tpu.memory_space<vmem>>, %arg3: memref<1x128xf32, #tpu.memory_space<vmem>>, %arg4: memref<1x128xi32, #tpu.memory_space<vmem>>, %arg5: memref<128x128xf32, #tpu.memory_space<vmem>>, %arg6: memref<16x128xf32, #tpu.memory_space<vmem>>, %arg7: memref<16x1xf32, #tpu.memory_space<vmem>>, %arg8: memref<16x1xf32, #tpu.memory_space<vmem>>, %arg9: memref<16x128xf32, #tpu.memory_space<vmem>>) attributes {dimension_semantics = [#tpu.dimension_semantics<parallel>, #tpu.dimension_semantics<arbitrary>], iteration_bounds = array<i64: 1, 1>, scalar_prefetch = 0 : i64, scratch_operands = 3 : i64, tpu.core_type = #tpu.core_type<tc>, window_params = [{transform_indices = @transform_0, window_bounds = array<i64: 1, 128>}, {transform_indices = @transform_1, window_bounds = array<i64: 1, 128>}, {transform_indices = @transform_2, window_bounds = array<i64: 1, 128>}, {transform_indices = @transform_3, window_bounds = array<i64: 128, 128>}, {transform_indices = @transform_4, window_bounds = array<i64: 16, 128>}]} {
    %c0_i32 = arith.constant 0 : i32
    %0 = arith.cmpi eq, %arg1, %c0_i32 : i32
    %1 = arith.extui %0 : i1 to i32
    %c0_i32_0 = arith.constant 0 : i32
    %2 = arith.cmpi ne, %1, %c0_i32_0 : i32
    scf.if %2 {
      %cst_30 = arith.constant -1.000000e+30 : f32
      %55 = vector.broadcast %cst_30 : f32 to vector<16x1xf32>
      %c0_31 = arith.constant 0 : index
      %c0_32 = arith.constant 0 : index
      %56 = vector.load %arg7[%c0_31, %c0_32] : memref<16x1xf32, #tpu.memory_space<vmem>>, vector<16x1xf32>
      tpu.vector_store %arg7[%c0_31, %c0_32], %55 {strides = array<i32>} : memref<16x1xf32, #tpu.memory_space<vmem>>, vector<16x1xf32>,
      %cst_33 = arith.constant 0.000000e+00 : f32
      %57 = vector.broadcast %cst_33 : f32 to vector<16x1xf32>
      %c0_34 = arith.constant 0 : index
      %c0_35 = arith.constant 0 : index
      %58 = vector.load %arg8[%c0_34, %c0_35] : memref<16x1xf32, #tpu.memory_space<vmem>>, vector<16x1xf32>
      tpu.vector_store %arg8[%c0_34, %c0_35], %57 {strides = array<i32>} : memref<16x1xf32, #tpu.memory_space<vmem>>, vector<16x1xf32>,
      %cst_36 = arith.constant 0.000000e+00 : f32
      %59 = vector.broadcast %cst_36 : f32 to vector<16x128xf32>
      %c0_37 = arith.constant 0 : index
      %c0_38 = arith.constant 0 : index
      %60 = vector.load %arg9[%c0_37, %c0_38] : memref<16x128xf32, #tpu.memory_space<vmem>>, vector<16x128xf32>
      tpu.vector_store %arg9[%c0_37, %c0_38], %59 {strides = array<i32>} : memref<16x128xf32, #tpu.memory_space<vmem>>, vector<16x128xf32>,
    } else {
    }
    %c0 = arith.constant 0 : index
    %c0_1 = arith.constant 0 : index
    %3 = vector.load %arg2[%c0, %c0_1] : memref<1x128xf32, #tpu.memory_space<vmem>>, vector<1x128xf32>
    %c0_2 = arith.constant 0 : index
    %c0_3 = arith.constant 0 : index
    %4 = vector.load %arg3[%c0_2, %c0_3] : memref<1x128xf32, #tpu.memory_space<vmem>>, vector<1x128xf32>
    %5 = arith.addf %3, %4 : vector<1x128xf32>
    %cst = arith.constant 0.000000e+00 : f32
    %6 = vector.broadcast %cst : f32 to vector<1x128xf32>
    %7 = arith.cmpf ogt, %5, %6 : vector<1x128xf32>
    %cst_4 = arith.constant 0.00999999977 : f32
    %8 = vector.broadcast %cst_4 : f32 to vector<1x128xf32>
    %9 = arith.mulf %8, %5 : vector<1x128xf32>
    %10 = arith.select %7, %5, %9 : vector<1x128xi1>, vector<1x128xf32>
    %11 = tpu.iota {dimensions = array<i32: 0>} : vector<16x128xi32>
    %c0_5 = arith.constant 0 : index
    %c0_6 = arith.constant 0 : index
    %12 = vector.load %arg4[%c0_5, %c0_6] : memref<1x128xi32, #tpu.memory_space<vmem>>, vector<1x128xi32>
    %13 = vector.broadcast %12 : vector<1x128xi32> to vector<16x128xi32>
    %14 = arith.cmpi eq, %13, %11 : vector<16x128xi32>
    %15 = arith.extui %14 : vector<16x128xi1> to vector<16x128xi32>
    %16 = arith.sitofp %15 : vector<16x128xi32> to vector<16x128xf32>
    %cst_7 = arith.constant -1.000000e+30 : f32
    %17 = vector.shape_cast %10 : vector<1x128xf32> to vector<1x128xf32>
    %18 = vector.broadcast %17 : vector<1x128xf32> to vector<16x128xf32>
    %19 = vector.broadcast %cst_7 : f32 to vector<16x128xf32>
    %20 = arith.select %14, %18, %19 : vector<16x128xi1>, vector<16x128xf32>
    %cst_8 = arith.constant dense<0xFF800000> : vector<16xf32>
    %21 = vector.multi_reduction <maximumf>, %20, %cst_8 [1] : vector<16x128xf32> to vector<16xf32>
    %22 = vector.shape_cast %21 : vector<16xf32> to vector<16x1xf32>
    %c0_9 = arith.constant 0 : index
    %c0_10 = arith.constant 0 : index
    %23 = vector.load %arg7[%c0_9, %c0_10] : memref<16x1xf32, #tpu.memory_space<vmem>>, vector<16x1xf32>
    %24 = arith.maximumf %23, %22 : vector<16x1xf32>
    %c0_11 = arith.constant 0 : index
    %c0_12 = arith.constant 0 : index
    %25 = vector.load %arg7[%c0_11, %c0_12] : memref<16x1xf32, #tpu.memory_space<vmem>>, vector<16x1xf32>
    %26 = arith.subf %25, %24 : vector<16x1xf32>
    %27 = math.exp %26 : vector<16x1xf32>
    %28 = vector.broadcast %24 : vector<16x1xf32> to vector<16x128xf32>
    %29 = arith.mulf %16, %28 : vector<16x128xf32>
    %cst_13 = arith.constant dense<0.000000e+00> : vector<128xf32>
    %30 = vector.multi_reduction <add>, %29, %cst_13 [0] : vector<16x128xf32> to vector<128xf32>
    %31 = vector.shape_cast %30 : vector<128xf32> to vector<1x128xf32>
    %32 = arith.subf %10, %31 : vector<1x128xf32>
    %33 = math.exp %32 : vector<1x128xf32>
    %c0_14 = arith.constant 0 : index
    %c0_15 = arith.constant 0 : index
    %34 = vector.load %arg8[%c0_14, %c0_15] : memref<16x1xf32, #tpu.memory_space<vmem>>, vector<16x1xf32>
    %35 = arith.mulf %27, %34 : vector<16x1xf32>
    %36 = vector.broadcast %33 : vector<1x128xf32> to vector<16x128xf32>
    %37 = arith.mulf %16, %36 : vector<16x128xf32>
    %cst_16 = arith.constant dense<0.000000e+00> : vector<16xf32>
    %38 = vector.multi_reduction <add>, %37, %cst_16 [1] : vector<16x128xf32> to vector<16xf32>
    %39 = vector.shape_cast %38 : vector<16xf32> to vector<16x1xf32>
    %40 = arith.addf %35, %39 : vector<16x1xf32>
    %c0_17 = arith.constant 0 : index
    %c0_18 = arith.constant 0 : index
    %41 = vector.load %arg8[%c0_17, %c0_18] : memref<16x1xf32, #tpu.memory_space<vmem>>, vector<16x1xf32>
    tpu.vector_store %arg8[%c0_17, %c0_18], %40 {strides = array<i32>} : memref<16x1xf32, #tpu.memory_space<vmem>>, vector<16x1xf32>,
    %42 = vector.broadcast %33 : vector<1x128xf32> to vector<16x128xf32>
    %43 = arith.mulf %16, %42 : vector<16x128xf32>
    %c0_19 = arith.constant 0 : index
    %c0_20 = arith.constant 0 : index
    %44 = vector.load %arg9[%c0_19, %c0_20] : memref<16x128xf32, #tpu.memory_space<vmem>>, vector<16x128xf32>
    %45 = vector.broadcast %27 : vector<16x1xf32> to vector<16x128xf32>
    %46 = arith.mulf %45, %44 : vector<16x128xf32>
    %c0_21 = arith.constant 0 : index
    %c0_22 = arith.constant 0 : index
    %47 = vector.load %arg5[%c0_21, %c0_22] : memref<128x128xf32, #tpu.memory_space<vmem>>, vector<128x128xf32>
    %cst_23 = arith.constant dense<0.000000e+00> : vector<16x128xf32>
    %48 = tpu.matmul %43, %47, %cst_23 {dimension_numbers = #tpu.dot_dimension_numbers<[1], [0], [0], [1], [0, 0, 1, 1], [], []>} : vector<16x128xf32>, vector<128x128xf32>, vector<16x128xf32> -> vector<16x128xf32>
    %49 = arith.addf %46, %48 : vector<16x128xf32>
    %c0_24 = arith.constant 0 : index
    %c0_25 = arith.constant 0 : index
    %50 = vector.load %arg9[%c0_24, %c0_25] : memref<16x128xf32, #tpu.memory_space<vmem>>, vector<16x128xf32>
    tpu.vector_store %arg9[%c0_24, %c0_25], %49 {strides = array<i32>} : memref<16x128xf32, #tpu.memory_space<vmem>>, vector<16x128xf32>,
    %c0_26 = arith.constant 0 : index
    %c0_27 = arith.constant 0 : index
    %51 = vector.load %arg7[%c0_26, %c0_27] : memref<16x1xf32, #tpu.memory_space<vmem>>, vector<16x1xf32>
    tpu.vector_store %arg7[%c0_26, %c0_27], %24 {strides = array<i32>} : memref<16x1xf32, #tpu.memory_space<vmem>>, vector<16x1xf32>,
    %c0_i32_28 = arith.constant 0 : i32
    %52 = arith.cmpi eq, %arg1, %c0_i32_28 : i32
    %53 = arith.extui %52 : i1 to i32
    %c0_i32_29 = arith.constant 0 : i32
    %54 = arith.cmpi ne, %53, %c0_i32_29 : i32
    scf.if %54 {
      %c0_30 = arith.constant 0 : index
      %c0_31 = arith.constant 0 : index
      %55 = vector.load %arg8[%c0_30, %c0_31] : memref<16x1xf32, #tpu.memory_space<vmem>>, vector<16x1xf32>
      %cst_32 = arith.constant 0.000000e+00 : f32
      %56 = vector.broadcast %cst_32 : f32 to vector<16x1xf32>
      %57 = arith.cmpf ogt, %55, %56 : vector<16x1xf32>
      %cst_33 = arith.constant 1.000000e+00 : f32
      %58 = vector.broadcast %cst_33 : f32 to vector<16x1xf32>
      %59 = arith.select %57, %55, %58 : vector<16x1xi1>, vector<16x1xf32>
      %cst_34 = arith.constant 0.000000e+00 : f32
      %60 = vector.broadcast %cst_34 : f32 to vector<16x1xf32>
      %61 = arith.cmpf ogt, %55, %60 : vector<16x1xf32>
      %c0_35 = arith.constant 0 : index
      %c0_36 = arith.constant 0 : index
      %62 = vector.load %arg9[%c0_35, %c0_36] : memref<16x128xf32, #tpu.memory_space<vmem>>, vector<16x128xf32>
      %63 = vector.broadcast %59 : vector<16x1xf32> to vector<16x128xf32>
      %64 = arith.divf %62, %63 : vector<16x128xf32>
      %cst_37 = arith.constant 0.000000e+00 : f32
      %65 = vector.shape_cast %61 : vector<16x1xi1> to vector<16x1xi1>
      %66 = vector.broadcast %65 : vector<16x1xi1> to vector<16x128xi1>
      %67 = vector.broadcast %cst_37 : f32 to vector<16x128xf32>
      %68 = arith.select %66, %64, %67 : vector<16x128xi1>, vector<16x128xf32>
      %c0_38 = arith.constant 0 : index
      %c0_39 = arith.constant 0 : index
      %69 = vector.load %arg6[%c0_38, %c0_39] : memref<16x128xf32, #tpu.memory_space<vmem>>, vector<16x128xf32>
      tpu.vector_store %arg6[%c0_38, %c0_39], %68 {strides = array<i32>} : memref<16x128xf32, #tpu.memory_space<vmem>>, vector<16x128xf32>,
    } else {
    }
    return
  }
  func.func @transform_0(%arg0: i32, %arg1: i32) -> (i32, i32) {
    %c0_i32 = arith.constant 0 : i32
    %c0_i32_0 = arith.constant 0 : i32
    return %c0_i32, %arg1 : i32, i32
  }
  func.func @transform_1(%arg0: i32, %arg1: i32) -> (i32, i32) {
    %c0_i32 = arith.constant 0 : i32
    %c0_i32_0 = arith.constant 0 : i32
    return %c0_i32, %arg1 : i32, i32
  }
  func.func @transform_2(%arg0: i32, %arg1: i32) -> (i32, i32) {
    %c0_i32 = arith.constant 0 : i32
    %c0_i32_0 = arith.constant 0 : i32
    return %c0_i32, %arg1 : i32, i32
  }
  func.func @transform_3(%arg0: i32, %arg1: i32) -> (i32, i32) {
    %c0_i32 = arith.constant 0 : i32
    return %arg1, %arg0 : i32, i32
  }
  func.func @transform_4(%arg0: i32, %arg1: i32) -> (i32, i32) {
    %c0_i32 = arith.constant 0 : i32
    %c0_i32_0 = arith.constant 0 : i32
    return %c0_i32, %arg0 : i32, i32
  }
}

</mosaic_0001>

<llo_original>
// kernel: tpu_custom_call.1
$region0: #{tpu_custom_call.1}
  #allocation0 [shape = 'u32[]', space=smem, size = 0x4, offset = 0x4, fixed_abs, tag = 'smem constant byte address 0x4 - core index']
  #allocation1 [shape = 'u32[72,128]{1,0:T(1,128)}', space=vmem, size = 0x9000, scoped, tag = 'internal scratch']
  #allocation2 [shape = 'f32[16,1]{1,0:T(8,128)}', space=vmem, size = 0x2000, scoped, tag = 'scratch operand']
  #allocation3 [shape = 'f32[16,1]{1,0:T(8,128)}', space=vmem, size = 0x2000, scoped, tag = 'scratch operand']
  #allocation4 [shape = 'f32[16,128]{1,0:T(8,128)}', space=vmem, size = 0x2000, scoped, tag = 'scratch operand']
  %s0 = inlined_call_operand.hbm [shape: f32[1,128], index: 0, kind: input, shape index: {}]
  %s1 = inlined_call_operand.hbm [shape: f32[1,128], index: 1, kind: input, shape index: {}]
  %s2 = inlined_call_operand.vmem [shape: s32[1,128], index: 2, kind: input, shape index: {}]
  %s3 = inlined_call_operand.hbm [shape: f32[128,128], index: 3, kind: input, shape index: {}]
  %s4 = inlined_call_operand.hbm [shape: f32[16,128], index: 4, kind: output, shape index: {}]
  %s5 = sld [smem:[#allocation0]]
  $region46: #{tpu_custom_call.1} parent=0
    _
  %s7 = ssub.s32 1, %s5
  %s8 = scalar_select 0, %s7, %s5
  $region1: #{tpu_custom_call.1} parent=0
    #allocation5 [shape = 'u8[512]{0}', space=vmem, size = 0x400, scoped, tag = 'input window, operand 0, single buffered']
    #allocation6 [shape = 's32[1]{0}', space=sflag, size = 0x4, scoped, tag = 'scoped memory for tpu_custom_call.1']
    #allocation7 [shape = 's32[1]{0}', space=sflag, size = 0x4, scoped, tag = 'scoped memory for tpu_custom_call.1']
    #allocation8 [shape = 'u8[512]{0}', space=vmem, size = 0x400, scoped, tag = 'input window, operand 1, single buffered']
    #allocation9 [shape = 's32[1]{0}', space=sflag, size = 0x4, scoped, tag = 'scoped memory for tpu_custom_call.1']
    #allocation10 [shape = 'u8[65536]{0}', space=vmem, size = 0x10000, scoped, tag = 'input window, operand 3, single buffered']
    #allocation11 [shape = 'u8[8192]{0}', space=vmem, size = 0x2000, scoped, tag = 'output window, operand 0, single buffered']
    %9 = vsyncpa [#allocation6], 0
    %10 = vsyncpa [#allocation9], 0
    %11 = vsyncpa [#allocation7], 0
    // Predicated region
    $region2: #{tpu_custom_call.1} parent=1 // pred_check
      _
    $region3: #{tpu_custom_call.1} parent=1 // pred_check_branch
      %13 = sbr.rel (0) target = $region5
    $region4: #{tpu_custom_call.1} parent=1 // pred_region
      %15 = vsyncadd [#allocation6], 0
      %s17 = sshll.u32 %s0, 4
      %s18 = int_to_ptr.hbm [resolvable:$true] %s17
      %s19 = sshll.u32 [#allocation5], 4
      %s20 = int_to_ptr.vmem [resolvable:$true] %s19
      %22 = dma.hbm_to_vmem [thread:$0]  %s18, 16, %s20, [#allocation6]
    $region5: #{tpu_custom_call.1} parent=1 // pred_fallthru
      _
    // Predicated region
    $region6: #{tpu_custom_call.1} parent=1 // pred_check
      _
    $region7: #{tpu_custom_call.1} parent=1 // pred_check_branch
      %24 = sbr.rel (0) target = $region9
    $region8: #{tpu_custom_call.1} parent=1 // pred_region
      %26 = vsyncadd [#allocation9], 0
      %s28 = sshll.u32 %s1, 4
      %s29 = int_to_ptr.hbm [resolvable:$true] %s28
      %s30 = sshll.u32 [#allocation8], 4
      %s31 = int_to_ptr.vmem [resolvable:$true] %s30
      %33 = dma.hbm_to_vmem [thread:$0]  %s29, 16, %s31, [#allocation9]
    $region9: #{tpu_custom_call.1} parent=1 // pred_fallthru
      _
    // Predicated region
    $region10: #{tpu_custom_call.1} parent=1 // pred_check
      _
    $region11: #{tpu_custom_call.1} parent=1 // pred_check_branch
      %35 = sbr.rel (0) target = $region13
    $region12: #{tpu_custom_call.1} parent=1 // pred_region
      _
    $region13: #{tpu_custom_call.1} parent=1 // pred_fallthru
      _
    // Predicated region
    $region14: #{tpu_custom_call.1} parent=1 // pred_check
      _
    $region15: #{tpu_custom_call.1} parent=1 // pred_check_branch
      %37 = sbr.rel (0) target = $region17
    $region16: #{tpu_custom_call.1} parent=1 // pred_region
      %39 = vsyncadd [#allocation9], 0
      %s40 = sshll.u32 %s3, 4
      %s41 = int_to_ptr.hbm [resolvable:$true] %s40
      %s42 = sshll.u32 [#allocation10], 4
      %s43 = int_to_ptr.vmem [resolvable:$true] %s42
      %48 = dma.hbm_to_vmem [thread:$0]  %s41, 2048, %s43, [#allocation9], 128, 128, 8
    $region17: #{tpu_custom_call.1} parent=1 // pred_fallthru
      _
    // Predicated region
    $region18: #{tpu_custom_call.1} parent=1 // pred_check
      _
    $region19: #{tpu_custom_call.1} parent=1 // pred_check_branch
      %50 = sbr.rel (0) target = $region21
    $region20: #{tpu_custom_call.1} parent=1 // pred_region
      %52 = dma.done [#allocation6], 16
    $region21: #{tpu_custom_call.1} parent=1 // pred_fallthru
      _
    // Predicated region
    $region22: #{tpu_custom_call.1} parent=1 // pred_check
      _
    $region23: #{tpu_custom_call.1} parent=1 // pred_check_branch
      %54 = sbr.rel (0) target = $region25
    $region24: #{tpu_custom_call.1} parent=1 // pred_region
      %56 = dma.done [#allocation9], 16
    $region25: #{tpu_custom_call.1} parent=1 // pred_fallthru
      _
    // Predicated region
    $region26: #{tpu_custom_call.1} parent=1 // pred_check
      _
    $region27: #{tpu_custom_call.1} parent=1 // pred_check_branch
      %58 = sbr.rel (0) target = $region29
    $region28: #{tpu_custom_call.1} parent=1 // pred_region
      %60 = dma.done [#allocation9], 2048
    $region29: #{tpu_custom_call.1} parent=1 // pred_fallthru
      _
    %p61 = scmp.eq.s32.totalorder 0, 0
    // Predicated region
    $region30: #{tpu_custom_call.1} parent=1 // pred_check
      %p62 = pneg %p61
    $region31: #{tpu_custom_call.1} parent=1 // pred_check_branch
      %64 = sbr.rel (%p62) target = $region33
    $region32: #{tpu_custom_call.1} parent=1 // pred_region
      %vm65 = vcmask 7168
      %66 = vst.msk [vmem:[#allocation2] sm:$0xff] %vm65, -1e+30
      %67 = vst.msk [vmem:[#allocation2 + $0x8] sm:$0xff] %vm65, -1e+30
      %68 = vst.msk [vmem:[#allocation3] sm:$0xff] %vm65, 0.0
      %69 = vst.msk [vmem:[#allocation3 + $0x8] sm:$0xff] %vm65, 0.0
      %70 = vst [vmem:[#allocation4] sm:$0xff] 0.0
      %71 = vst [vmem:[#allocation4 + $0x8] sm:$0xff] 0.0
    $region33: #{tpu_custom_call.1} parent=1 // pred_fallthru
      _
    %v72 = vld [vmem:[#allocation5] sm:$0x1]
    %v73 = vld [vmem:[#allocation8] sm:$0x1]
    %v74 = vadd.f32 %v72, %v73
    %vm75 = vcmp.gt.f32.partialorder %v74, 0.0
    %v76 = vmul.f32 %v74, 0.01
    %v77 = vsel %vm75, %v74, %v76
    %v78 = vlaneseq
    %v79 = vshrl.u32 %v78, 7
    %v80 = vadd.s32 %v79, 8
    %v81 = vld [vmem:[%s2] sm:$0x1]
    %v82 = vperm.slane %v81, 0
    %vm83 = vcmp.eq.s32.totalorder %v82, %v79
    %vm84 = vcmp.eq.s32.totalorder %v82, %v80
    %v85 = vsel %vm83, 1, 0
    %v86 = vsel %vm84, 1, 0
    %v87 = vcvt.s32.f32 %v85
    %v88 = vcvt.s32.f32 %v86
    %v90 = vperm.slane %v77, 0
    %v92 = vsel %vm83, %v90, -1e+30
    %v93 = vsel %vm84, %v90, -1e+30
    %94 = vmax.xlane.f32.xlu0 %v92
    %v95 = vpop.xlane.xlu0 %94
    %96 = vmax.xlane.f32.xlu0 %v93
    %v97 = vpop.xlane.xlu0 %96
    %v98 = vld [vmem:[#allocation2] sm:$0xff]
    %v99 = vld [vmem:[#allocation2 + $0x8] sm:$0xff]
    %v100 = vmax.f32 %v98, %v95
    %v101 = vmax.f32 %v99, %v97
    %v102 = vsub.f32 %v98, %v100
    %v103 = vsub.f32 %v99, %v101
    %v104 = vmul.f32 %v102, 1.442695
    %v105 = vpow.pop %v104
    %v106 = vmul.f32 %v103, 1.442695
    %v107 = vpow.pop %v106
    %109 = vset.pattern.permute.xlu0 0
    %110 = vperm.xlu0 %109, %v100
    %v111 = vpop.permute.xlu0 %110
    %114 = vset.pattern.permute.xlu0 0
    %115 = vperm.xlu0 %114, %v101
    %v116 = vpop.permute.xlu0 %115
    %v118 = vmul.f32 %v87, %v111
    %v119 = vmul.f32 %v88, %v116
    %v120 = vadd.f32 %v118, %v119
    %v121 = vrot.slane %v120, 4
    %v122 = vadd.f32 %v120, %v121
    %v123 = vrot.slane %v122, 2
    %v124 = vadd.f32 %v122, %v123
    %v125 = vrot.slane %v124, 1
    %v126 = vadd.f32 %v124, %v125
    %v127 = vsub.f32 %v77, %v126
    %v128 = vmul.f32 %v127, 1.442695
    %v129 = vpow.pop %v128
    %v130 = vld [vmem:[#allocation3] sm:$0xff]
    %v131 = vld [vmem:[#allocation3 + $0x8] sm:$0xff]
    %v132 = vmul.f32 %v105, %v130
    %v133 = vmul.f32 %v107, %v131
    %v135 = vperm.slane %v129, 0
    %v137 = vmul.f32 %v87, %v135
    %v138 = vmul.f32 %v88, %v135
    %139 = vadd.xlane.f32.xlu0 %v137
    %v140 = vpop.xlane.xlu0 %139
    %141 = vadd.xlane.f32.xlu0 %v138
    %v142 = vpop.xlane.xlu0 %141
    %v143 = vadd.f32 %v132, %v140
    %v144 = vadd.f32 %v133, %v142
    %vm145 = vcmask 7168
    %146 = vst.msk [vmem:[#allocation3] sm:$0xff] %vm145, %v143
    %147 = vst.msk [vmem:[#allocation3 + $0x8] sm:$0xff] %vm145, %v144
    %v148 = vld [vmem:[#allocation4] sm:$0xff]
    %v149 = vld [vmem:[#allocation4 + $0x8] sm:$0xff]
    %151 = vset.pattern.permute.xlu0 0
    %152 = vperm.xlu0 %151, %v105
    %v153 = vpop.permute.xlu0 %152
    %156 = vset.pattern.permute.xlu0 0
    %157 = vperm.xlu0 %156, %v107
    %v158 = vpop.permute.xlu0 %157
    %v160 = vmul.f32 %v153, %v148
    %v161 = vmul.f32 %v158, %v149
    %v162 = vld [vmem:[#allocation10] sm:$0xff]
    %v163 = vld [vmem:[#allocation10 + $0x8] sm:$0xff]
    %v164 = vld [vmem:[#allocation10 + $0x10] sm:$0xff]
    %v165 = vld [vmem:[#allocation10 + $0x18] sm:$0xff]
    %v166 = vld [vmem:[#allocation10 + $0x20] sm:$0xff]
    %v167 = vld [vmem:[#allocation10 + $0x28] sm:$0xff]
    %v168 = vld [vmem:[#allocation10 + $0x30] sm:$0xff]
    %v169 = vld [vmem:[#allocation10 + $0x38] sm:$0xff]
    %v170 = vld [vmem:[#allocation10 + $0x40] sm:$0xff]
    %v171 = vld [vmem:[#allocation10 + $0x48] sm:$0xff]
    %v172 = vld [vmem:[#allocation10 + $0x50] sm:$0xff]
    %v173 = vld [vmem:[#allocation10 + $0x58] sm:$0xff]
    %v174 = vld [vmem:[#allocation10 + $0x60] sm:$0xff]
    %v175 = vld [vmem:[#allocation10 + $0x68] sm:$0xff]
    %v176 = vld [vmem:[#allocation10 + $0x70] sm:$0xff]
    %v177 = vld [vmem:[#allocation10 + $0x78] sm:$0xff]
    %178 = vmatpush.msra.mxu0 %v177
    %179 = vmatpush.msra.mxu0 %v176
    %180 = vmatpush.msra.mxu0 %v175
    %181 = vmatpush.msra.mxu0 %v174
    %182 = vmatpush.msra.mxu0 %v173
    %183 = vmatpush.msra.mxu0 %v172
    %184 = vmatpush.msra.mxu0 %v171
    %185 = vmatpush.msra.mxu0 %v170
    %186 = vmatpush.msra.mxu0 %v169
    %187 = vmatpush.msra.mxu0 %v168
    %188 = vmatpush.msra.mxu0 %v167
    %189 = vmatpush.msra.mxu0 %v166
    %190 = vmatpush.msra.mxu0 %v165
    %191 = vmatpush.msra.mxu0 %v164
    %192 = vmatpush.msra.mxu0 %v163
    %193 = vmatpush.msra.mxu0 %v162
    %194 = vmatmul.f32.gmra.mxu0 %v137
    %v195 = vpop.f32.mrf.mxu0
    %v196 = vadd.f32 0.0, %v195
    %197 = vmatmul.f32.gmra.mxu0 %v138
    %v198 = vpop.f32.mrf.mxu0
    %v199 = vadd.f32 0.0, %v198
    %200 = vdwg.mxu0
    %v201 = vadd.f32 %v160, %v196
    %v202 = vadd.f32 %v161, %v199
    %203 = vst [vmem:[#allocation4] sm:$0xff] %v201
    %204 = vst [vmem:[#allocation4 + $0x8] sm:$0xff] %v202
    %205 = vst.msk [vmem:[#allocation2] sm:$0xff] %vm145, %v100
    %206 = vst.msk [vmem:[#allocation2 + $0x8] sm:$0xff] %vm145, %v101
    // Predicated region
    $region34: #{tpu_custom_call.1} parent=1 // pred_check
      %p207 = pneg %p61
    $region35: #{tpu_custom_call.1} parent=1 // pred_check_branch
      %209 = sbr.rel (%p207) target = $region37
    $region36: #{tpu_custom_call.1} parent=1 // pred_region
      %v210 = vld [vmem:[#allocation3] sm:$0xff]
      %v211 = vld [vmem:[#allocation3 + $0x8] sm:$0xff]
      %vm212 = vcmp.gt.f32.partialorder %v210, 0.0
      %vm213 = vcmp.gt.f32.partialorder %v211, 0.0
      %v214 = vsel %vm212, %v210, 1.0
      %v215 = vsel %vm213, %v211, 1.0
      %v216 = vld [vmem:[#allocation4] sm:$0xff]
      %v217 = vld [vmem:[#allocation4 + $0x8] sm:$0xff]
      %219 = vset.pattern.permute.xlu0 0
      %220 = vperm.xlu0 %219, %v214
      %v221 = vpop.permute.xlu0 %220
      %224 = vset.pattern.permute.xlu0 0
      %225 = vperm.xlu0 %224, %v215
      %v226 = vpop.permute.xlu0 %225
      %v228 = vrcp.pop %v221
      %v229 = vmul.f32 %v221, %v228
      %v230 = vsub.f32 1.0, %v229
      %v231 = vmul.f32 %v228, %v230
      %v232 = vadd.f32 %v228, %v231
      %vm233 = vweird.f32 %v221
      %vm234 = vweird.f32 %v228
      %vm235 = vmor %vm233, %vm234
      %v236 = vsel %vm235, %v228, %v232
      %v237 = vand.u32 2147483647, %v221
      %vm238 = vcmp.eq.f32.partialorder %v237, 8.507059e+37
      %v239 = vand.u32 %v221, 2147483648
      %v240 = vor.u32 1.1754944e-38, %v239
      %v241 = vsel %vm238, %v240, %v236
      %v242 = vmul.f32 %v216, %v241
      %v243 = vrcp.pop %v226
      %v244 = vmul.f32 %v226, %v243
      %v245 = vsub.f32 1.0, %v244
      %v246 = vmul.f32 %v243, %v245
      %v247 = vadd.f32 %v243, %v246
      %vm248 = vweird.f32 %v226
      %vm249 = vweird.f32 %v243
      %vm250 = vmor %vm248, %vm249
      %v251 = vsel %vm250, %v243, %v247
      %v252 = vand.u32 2147483647, %v226
      %vm253 = vcmp.eq.f32.partialorder %v252, 8.507059e+37
      %v254 = vand.u32 %v226, 2147483648
      %v255 = vor.u32 1.1754944e-38, %v254
      %v256 = vsel %vm253, %v255, %v251
      %v257 = vmul.f32 %v217, %v256
      %v258 = vsel %vm212, 1, 0
      %v259 = vsel %vm213, 1, 0
      %260 = vset.pattern.permute.xlu0 0
      %261 = vperm.xlu0 %260, %v258
      %v262 = vpop.permute.xlu0 %261
      %263 = vset.pattern.permute.xlu0 0
      %264 = vperm.xlu0 %263, %v259
      %v265 = vpop.permute.xlu0 %264
      %vm266 = vcmp.eq.s32.totalorder %v262, 1
      %vm267 = vcmp.eq.s32.totalorder %v265, 1
      %v268 = vsel %vm266, %v242, 0.0
      %v269 = vsel %vm267, %v257, 0.0
      %270 = vst [vmem:[#allocation11] sm:$0xff] %v268
      %271 = vst [vmem:[#allocation11 + $0x8] sm:$0xff] %v269
    $region37: #{tpu_custom_call.1} parent=1 // pred_fallthru
      _
    // Predicated region
    $region38: #{tpu_custom_call.1} parent=1 // pred_check
      _
    $region39: #{tpu_custom_call.1} parent=1 // pred_check_branch
      %273 = sbr.rel (0) target = $region41
    $region40: #{tpu_custom_call.1} parent=1 // pred_region
      %275 = vsyncadd [#allocation7], 0
      %s276 = sshll.u32 [#allocation11], 4
      %s277 = int_to_ptr.vmem [resolvable:$true] %s276
      %s278 = sshll.u32 %s4, 4
      %s279 = int_to_ptr.hbm [resolvable:$true] %s278
      %284 = dma.vmem_to_hbm [thread:$0]  %s277, 256, %s279, [#allocation7], 128, 128, 8
    $region41: #{tpu_custom_call.1} parent=1 // pred_fallthru
      _
    // Predicated region
    $region42: #{tpu_custom_call.1} parent=1 // pred_check
      _
    $region43: #{tpu_custom_call.1} parent=1 // pred_check_branch
      %286 = sbr.rel (0) target = $region45
    $region44: #{tpu_custom_call.1} parent=1 // pred_region
      %288 = dma.done [#allocation7], 256
    $region45: #{tpu_custom_call.1} parent=1 // pred_fallthru
      _
    %289 = vsyncpa [#allocation6], 1
    %290 = vsyncpa [#allocation9], 1
    %291 = vsyncpa [#allocation7], 1

</llo_original>
